<compile_context>
chip_gen: v7x
topology: tpu7x:2x2x1
jax: 0.10.0
libtpu: 0.0.40
codegen_flags: <defaults>
</compile_context>

<pallas_src>
import jax
import jax.numpy as jnp
from jax.experimental import pallas as pl
from jax.experimental.pallas import tpu as pltpu

IN_DIM = 8             # input features
IN_AUG = IN_DIM + 1    # +1 ones row folds the fc1 bias into the matmul
HID_DIM = 100          # hidden units in the PyTorch module
HID_PAD = 128          # hidden units padded to a full lane width
OUT_DIM = 1            # output units


def net_kernel(xt_ref, w1t_ref, w2t_ref, b2_ref, o_ref):
    # Layer 1 (+ folded bias) on the MXU, batch on the lane axis:
    #   (128, 9) @ (9, bm) -> (128, bm), f32 accumulation; ReLU on the VPU.
    h = jnp.maximum(
        jnp.dot(w1t_ref[...], xt_ref[...], preferred_element_type=jnp.float32),
        0.0)
    # Layer 2 also on the MXU: (1, 128) @ (128, bm) -> lane-dense (1, bm).
    z = jnp.dot(w2t_ref[...], h, preferred_element_type=jnp.float32) + b2_ref[...]
    o_ref[...] = jax.nn.sigmoid(z)


def net_forward(x, w1, b1, w2, b2, *, block_m=4096, mxu_dtype=jnp.float32):
    """Forward pass of `Net`.

    x : (..., 8), flattened to (-1, 8) like `x.view(-1, 8)`.
    w1: (8, 100), b1: (1, 100), w2: (100, 1), b2: (1, 1)
        (weights stored (in, out): the kernel computes x @ W + b, i.e. PyTorch's
         x @ W.T + b with W in PyTorch's (out, in) layout.)
    mxu_dtype: dtype of the layer-1 MXU operands (x^T, [W1^T|b1]); use
        jnp.bfloat16 on v6e/v7x when accuracy allows (accumulation stays f32).
    Returns (B, 1) float32 sigmoid probabilities.
    """
    x = jnp.asarray(x, jnp.float32).reshape(-1, IN_DIM)   # mirrors x.view(-1, 8)
    B = x.shape[0]

    # Batch tile: large enough to amortize per-grid-step overhead, clamped so
    # the grid keeps >= 2 steps when the batch allows (v7x megacore), and never
    # over-tiling tiny batches.  Always a multiple of the 128-lane width.
    bm = min(int(block_m), pl.cdiv(B, 2 * 128) * 128)
    bm = max(128, (bm // 128) * 128)
    B_pad = pl.cdiv(B, bm) * bm
    grid = (B_pad // bm,)

    dt = jnp.float32 if mxu_dtype is None else mxu_dtype

    # Single fused pass over x: append the ones row (bias fold), zero-pad the
    # batch to B_pad, transpose to lane-dense (9, B_pad).  Padding is exact:
    # padded batch columns are discarded by the final slice; padded hidden rows
    # are zero in both W1^T and W2^T.
    # TODO(synk): if this forward is called repeatedly, produce x in (9, B)
    # layout upstream and skip this wrapper pass entirely.
    x_aug = jnp.concatenate([x, jnp.ones((B, 1), jnp.float32)], axis=1)  # (B, 9)
    xt = jnp.pad(x_aug, ((0, B_pad - B), (0, 0))).T.astype(dt)           # (9, B_pad)

    # [W1^T | b1] packed as (128, 9); rows >= 100 are zero (ReLU(0)=0 and the
    # matching W2^T columns are zero, so the math is unchanged).
    w1t = jnp.zeros((HID_PAD, IN_AUG), jnp.float32)
    w1t = w1t.at[:HID_DIM, :IN_DIM].set(jnp.asarray(w1, jnp.float32).T)
    w1t = w1t.at[:HID_DIM, IN_DIM].set(
        jnp.reshape(jnp.asarray(b1, jnp.float32), (HID_DIM,)))
    w1t = w1t.astype(dt)

    # W2 pre-transposed to (1, 128) so layer 2 is an MXU matmul.
    w2t = jnp.zeros((1, HID_PAD), jnp.float32).at[0, :HID_DIM].set(
        jnp.reshape(jnp.asarray(w2, jnp.float32), (HID_DIM,)))
    b2c = jnp.reshape(jnp.asarray(b2, jnp.float32), (1, OUT_DIM))

    # VMEM budget: dominated by the (128, bm) f32 hidden tile (and a couple of
    # unfused f32 temporaries), plus double-buffered input/output tiles.
    h_bytes = HID_PAD * bm * 4
    io_bytes = 2 * (IN_AUG * bm * xt.dtype.itemsize) + 2 * (bm * 4)
    w_bytes = 2 * 4 * (HID_PAD * IN_AUG + HID_PAD + OUT_DIM)
    vmem_limit = int(min(64 << 20,
                         max(32 << 20, 3 * h_bytes + io_bytes + w_bytes + (4 << 20))))

    cost = pl.CostEstimate(
        flops=2 * B_pad * IN_AUG * HID_PAD      # layer 1 matmul (+bias fold)
              + B_pad * HID_PAD                 # ReLU
              + 2 * B_pad * HID_PAD,            # layer 2 matmul
        transcendentals=B_pad,                  # sigmoid
        bytes_accessed=int(xt.size) * xt.dtype.itemsize
                       + 4 * (B_pad + HID_PAD * (IN_AUG + 1) + OUT_DIM),
    )

    out = pl.pallas_call(
        net_kernel,
        out_shape=jax.ShapeDtypeStruct((1, B_pad), jnp.float32),
        grid=grid,
        in_specs=[
            pl.BlockSpec((IN_AUG, bm), lambda i: (0, i)),        # x^T tile (+ ones row)
            pl.BlockSpec((HID_PAD, IN_AUG), lambda i: (0, 0)),   # [W1^T | b1] (resident)
            pl.BlockSpec((1, HID_PAD), lambda i: (0, 0)),        # W2^T        (resident)
            pl.BlockSpec((1, OUT_DIM), lambda i: (0, 0)),        # b2          (resident)
        ],
        out_specs=pl.BlockSpec((1, bm), lambda i: (0, i)),       # lane-dense output
        compiler_params=pltpu.CompilerParams(
            dimension_semantics=("parallel",),
            vmem_limit_bytes=vmem_limit),
        cost_estimate=cost,
    )(xt, w1t, w2t, b2c)

    return out[0, :B].reshape(B, OUT_DIM)


def init_params(key):
    """Deterministic init matching PyTorch nn.Linear default:
    U(-1/sqrt(fan_in), 1/sqrt(fan_in)) for both weights and biases."""
    k1, k2, k3, k4 = jax.random.split(key, 4)
    bound1 = 1.0 / jnp.sqrt(IN_DIM)
    bound2 = 1.0 / jnp.sqrt(HID_DIM)
    w1 = jax.random.uniform(k1, (IN_DIM, HID_DIM), jnp.float32, -bound1, bound1)
    b1 = jax.random.uniform(k2, (1, HID_DIM), jnp.float32, -bound1, bound1)
    w2 = jax.random.uniform(k3, (HID_DIM, OUT_DIM), jnp.float32, -bound2, bound2)
    b2 = jax.random.uniform(k4, (1, OUT_DIM), jnp.float32, -bound2, bound2)
    return w1, b1, w2, b2


if __name__ == "__main__":
    key = jax.random.PRNGKey(0)
    kx, kp = jax.random.split(key)

    B = 1000  # deliberately NOT a multiple of the batch tile (exercises padding)
    x = jax.random.normal(kx, (B, IN_DIM), jnp.float32)
    w1, b1, w2, b2 = init_params(kp)

    fwd = jax.jit(net_forward)
    out = jax.block_until_ready(fwd(x, w1, b1, w2, b2))

    # Plain-JAX reference (same math as the PyTorch module).
    ref = jax.nn.sigmoid(jnp.maximum(x @ w1 + b1, 0.0) @ w2 + b2)
    assert out.shape == (B, OUT_DIM)
    max_err = float(jnp.max(jnp.abs(out - ref)))
    assert jnp.allclose(out, ref, atol=2e-3, rtol=2e-3), f"max abs err {max_err}"

    print("KERNEL_OK")
</pallas_src>

<mosaic_0001>
module attributes {stable_mosaic.version = 11 : i64} {
  func.func @net_kernel(%arg0: i32, %arg1: memref<9x512xf32, #tpu.memory_space<vmem>>, %arg2: memref<128x9xf32, #tpu.memory_space<vmem>>, %arg3: memref<1x128xf32, #tpu.memory_space<vmem>>, %arg4: memref<1x1xf32, #tpu.memory_space<vmem>>, %arg5: memref<1x512xf32, #tpu.memory_space<vmem>>) attributes {dimension_semantics = [#tpu.dimension_semantics<parallel>], iteration_bounds = array<i64: 2>, scalar_prefetch = 0 : i64, scratch_operands = 0 : i64, tpu.core_type = #tpu.core_type<tc>, window_params = [{transform_indices = @transform_0, window_bounds = array<i64: 9, 512>}, {pipeline_mode = #tpu.pipeline_mode<synchronous>, transform_indices = @transform_1, window_bounds = array<i64: 128, 9>}, {pipeline_mode = #tpu.pipeline_mode<synchronous>, transform_indices = @transform_2, window_bounds = array<i64: 1, 128>}, {pipeline_mode = #tpu.pipeline_mode<synchronous>, transform_indices = @transform_3, window_bounds = array<i64: 1, 1>}, {transform_indices = @transform_4, window_bounds = array<i64: 1, 512>}]} {
    %c0 = arith.constant 0 : index
    %c0_0 = arith.constant 0 : index
    %0 = vector.load %arg2[%c0, %c0_0] : memref<128x9xf32, #tpu.memory_space<vmem>>, vector<128x9xf32>
    %c0_1 = arith.constant 0 : index
    %c0_2 = arith.constant 0 : index
    %1 = vector.load %arg1[%c0_1, %c0_2] : memref<9x512xf32, #tpu.memory_space<vmem>>, vector<9x512xf32>
    %cst = arith.constant dense<0.000000e+00> : vector<128x512xf32>
    %2 = tpu.matmul %0, %1, %cst {dimension_numbers = #tpu.dot_dimension_numbers<[1], [0], [0], [1], [0, 0, 1, 1], [], []>} : vector<128x9xf32>, vector<9x512xf32>, vector<128x512xf32> -> vector<128x512xf32>
    %cst_3 = arith.constant 0.000000e+00 : f32
    %3 = vector.broadcast %cst_3 : f32 to vector<128x512xf32>
    %4 = arith.maximumf %2, %3 : vector<128x512xf32>
    %c0_4 = arith.constant 0 : index
    %c0_5 = arith.constant 0 : index
    %5 = vector.load %arg3[%c0_4, %c0_5] : memref<1x128xf32, #tpu.memory_space<vmem>>, vector<1x128xf32>
    %cst_6 = arith.constant dense<0.000000e+00> : vector<1x512xf32>
    %6 = tpu.matmul %5, %4, %cst_6 {dimension_numbers = #tpu.dot_dimension_numbers<[1], [0], [0], [1], [0, 0, 1, 1], [], []>} : vector<1x128xf32>, vector<128x512xf32>, vector<1x512xf32> -> vector<1x512xf32>
    %c0_7 = arith.constant 0 : index
    %c0_8 = arith.constant 0 : index
    %7 = vector.load %arg4[%c0_7, %c0_8] : memref<1x1xf32, #tpu.memory_space<vmem>>, vector<1x1xf32>
    %8 = vector.broadcast %7 : vector<1x1xf32> to vector<1x512xf32>
    %9 = arith.addf %6, %8 : vector<1x512xf32>
    %10 = arith.negf %9 : vector<1x512xf32>
    %11 = math.exp %10 : vector<1x512xf32>
    %cst_9 = arith.constant 1.000000e+00 : f32
    %12 = vector.broadcast %cst_9 : f32 to vector<1x512xf32>
    %13 = arith.addf %12, %11 : vector<1x512xf32>
    %14 = arith.divf %12, %13 : vector<1x512xf32>
    %c0_10 = arith.constant 0 : index
    %c0_11 = arith.constant 0 : index
    %15 = vector.load %arg5[%c0_10, %c0_11] : memref<1x512xf32, #tpu.memory_space<vmem>>, vector<1x512xf32>
    tpu.vector_store %arg5[%c0_10, %c0_11], %14 {strides = array<i32>} : memref<1x512xf32, #tpu.memory_space<vmem>>, vector<1x512xf32>,
    return
  }
  func.func @transform_0(%arg0: i32) -> (i32, i32) {
    %c0_i32 = arith.constant 0 : i32
    %c0_i32_0 = arith.constant 0 : i32
    return %c0_i32, %arg0 : i32, i32
  }
  func.func @transform_1(%arg0: i32) -> (i32, i32) {
    %c0_i32 = arith.constant 0 : i32
    %c0_i32_0 = arith.constant 0 : i32
    %c0_i32_1 = arith.constant 0 : i32
    return %c0_i32, %c0_i32_0 : i32, i32
  }
  func.func @transform_2(%arg0: i32) -> (i32, i32) {
    %c0_i32 = arith.constant 0 : i32
    %c0_i32_0 = arith.constant 0 : i32
    %c0_i32_1 = arith.constant 0 : i32
    return %c0_i32, %c0_i32_0 : i32, i32
  }
  func.func @transform_3(%arg0: i32) -> (i32, i32) {
    %c0_i32 = arith.constant 0 : i32
    %c0_i32_0 = arith.constant 0 : i32
    %c0_i32_1 = arith.constant 0 : i32
    return %c0_i32, %c0_i32_0 : i32, i32
  }
  func.func @transform_4(%arg0: i32) -> (i32, i32) {
    %c0_i32 = arith.constant 0 : i32
    %c0_i32_0 = arith.constant 0 : i32
    return %c0_i32, %arg0 : i32, i32
  }
}

</mosaic_0001>

<llo_original>
// kernel: net_forward.1
$region0: #{net_forward.1}
  #allocation0 [shape = 'u32[]', space=smem, size = 0x4, offset = 0x4, fixed_abs, tag = 'smem constant byte address 0x4 - core index']
  #allocation1 [shape = 'u32[144,128]{1,0:T(1,128)}', space=vmem, size = 0x12000, scoped, tag = 'internal scratch']
  #allocation2 [shape = 'f32[1,1]{1,0:T(1,128)S(1)}', space=vmem, size = 0x200, scoped, tag = 'scoped memory for net_forward.1']
  %s0 = inlined_call_operand.vmem [shape: f32[9,1024], index: 0, kind: input, shape index: {}]
  %s1 = inlined_call_operand.vmem [shape: f32[128,9], index: 1, kind: input, shape index: {}]
  %s2 = inlined_call_operand.vmem [shape: f32[1,128], index: 2, kind: input, shape index: {}]
  %s3 = inlined_call_operand.<no memory space> [shape: f32[1,1], index: 3, kind: input, shape index: {}]
  %s4 = inlined_call_operand.vmem [shape: f32[1,1024], index: 4, kind: output, shape index: {}]
  %s5 = sld [smem:[#allocation0]]
  $region72: #{net_forward.1} parent=0
    _
  %s7 = ssub.s32 1, %s5
  %s8 = scalar_select 0, %s7, %s5
  %v9 = vstv %s3
  %10 = vst [vmem:[#allocation2] sm:$0x1] %v9
  $region1: #{net_forward.1} parent=0
    #allocation3 [shape = 'u8[65536]{0}', space=vmem, size = 0x10000, scoped, tag = 'input window, operand 0']
    loop: start=0, step=1, limit=4
    $region2: #{net_forward.1} parent=1 // loop_pre_header
      _
    $region3: #{net_forward.1} parent=1 // loop_header
      %s12 = sphi 0, %s16
      %p13 = scmp.ge.s32.totalorder %s12, 4
      %s22 = sphi 0, %s24
      %s25 = sphi 0, %s22
      %s26 = sphi 0, %s25
      %s42 = sphi 0, %s26
      %s46 = sphi 0, %s46
      %s48 = sphi 0, %s46
      %s49 = sphi 0, %s48
      %s63 = sphi 0, %s49
      %s67 = sphi 0, %s67
      %s69 = sphi 0, %s67
      %s70 = sphi 0, %s69
      %s84 = sphi 0, %s70
      %s88 = sphi 0, %s88
      %s90 = sphi 0, %s88
      %s91 = sphi 0, %s90
      %s105 = sphi 0, %s91
      %s111 = sphi 0, %s113
      %s114 = sphi 0, %s111
      %s115 = sphi 0, %s114
      %s131 = sphi 0, %s115
    $region4: #{net_forward.1} parent=1 // loop_header_branch
      %15 = sbr.rel (%p13) target = $region8
    $region5: #{net_forward.1} parent=1 // loop_body
      %s17 = ssub.s32 %s12, 1
      %s18 = ssub.s32 %s12, 2
      %s19 = sadd.s32 %s12, 1
      %s20 = ssub.s32 %s12, %s19
      %p21 = scmp.eq.s32.totalorder %s20, 0
      %s23 = sadd.s32 %s22, 1
      %s24 = scalar_select %p21, %s22, %s23
      %p27 = pneg %p21
      %p28 = scmp.eq.s32.totalorder %s12, 1
      %p29 = por %p27, %p28
      %p30 = scmp.ne.s32.totalorder %s22, %s25
      %p31 = scmp.eq.s32.totalorder %s12, 0
      %p32 = por %p30, %p31
      %p33 = scmp.ne.s32.totalorder %s22, %s25
      %p34 = scmp.eq.s32.totalorder %s17, 1
      %p35 = por %p33, %p34
      %p36 = scmp.ne.s32.totalorder %s25, %s26
      %p37 = scmp.eq.s32.totalorder %s17, 0
      %p38 = por %p36, %p37
      %p39 = scmp.ne.s32.totalorder %s25, %s26
      %p40 = scmp.eq.s32.totalorder %s18, 1
      %p41 = por %p39, %p40
      %p43 = scmp.ne.s32.totalorder %s26, %s42
      %p44 = scmp.eq.s32.totalorder %s18, 0
      %p45 = por %p43, %p44
      %s47 = sadd.s32 %s46, 1
      %p50 = scmp.eq.s32.totalorder %s12, 1
      %p51 = scmp.ne.s32.totalorder %s46, %s48
      %p52 = scmp.eq.s32.totalorder %s12, 0
      %p53 = por %p51, %p52
      %p54 = scmp.ne.s32.totalorder %s46, %s48
      %p55 = scmp.eq.s32.totalorder %s17, 1
      %p56 = por %p54, %p55
      %p57 = scmp.ne.s32.totalorder %s48, %s49
      %p58 = scmp.eq.s32.totalorder %s17, 0
      %p59 = por %p57, %p58
      %p60 = scmp.ne.s32.totalorder %s48, %s49
      %p61 = scmp.eq.s32.totalorder %s18, 1
      %p62 = por %p60, %p61
      %p64 = scmp.ne.s32.totalorder %s49, %s63
      %p65 = scmp.eq.s32.totalorder %s18, 0
      %p66 = por %p64, %p65
      %s68 = sadd.s32 %s67, 1
      %p71 = scmp.eq.s32.totalorder %s12, 1
      %p72 = scmp.ne.s32.totalorder %s67, %s69
      %p73 = scmp.eq.s32.totalorder %s12, 0
      %p74 = por %p72, %p73
      %p75 = scmp.ne.s32.totalorder %s67, %s69
      %p76 = scmp.eq.s32.totalorder %s17, 1
      %p77 = por %p75, %p76
      %p78 = scmp.ne.s32.totalorder %s69, %s70
      %p79 = scmp.eq.s32.totalorder %s17, 0
      %p80 = por %p78, %p79
      %p81 = scmp.ne.s32.totalorder %s69, %s70
      %p82 = scmp.eq.s32.totalorder %s18, 1
      %p83 = por %p81, %p82
      %p85 = scmp.ne.s32.totalorder %s70, %s84
      %p86 = scmp.eq.s32.totalorder %s18, 0
      %p87 = por %p85, %p86
      %s89 = sadd.s32 %s88, 1
      %p92 = scmp.eq.s32.totalorder %s12, 1
      %p93 = scmp.ne.s32.totalorder %s88, %s90
      %p94 = scmp.eq.s32.totalorder %s12, 0
      %p95 = por %p93, %p94
      %p96 = scmp.ne.s32.totalorder %s88, %s90
      %p97 = scmp.eq.s32.totalorder %s17, 1
      %p98 = por %p96, %p97
      %p99 = scmp.ne.s32.totalorder %s90, %s91
      %p100 = scmp.eq.s32.totalorder %s17, 0
      %p101 = por %p99, %p100
      %p102 = scmp.ne.s32.totalorder %s90, %s91
      %p103 = scmp.eq.s32.totalorder %s18, 1
      %p104 = por %p102, %p103
      %p106 = scmp.ne.s32.totalorder %s91, %s105
      %p107 = scmp.eq.s32.totalorder %s18, 0
      %p108 = por %p106, %p107
      %s109 = ssub.s32 %s12, %s19
      %p110 = scmp.eq.s32.totalorder %s109, 0
      %s112 = sadd.s32 %s111, 1
      %s113 = scalar_select %p110, %s111, %s112
      %p116 = pneg %p110
      %p117 = scmp.eq.s32.totalorder %s12, 1
      %p118 = por %p116, %p117
      %p119 = scmp.ne.s32.totalorder %s111, %s114
      %p120 = scmp.eq.s32.totalorder %s12, 0
      %p121 = por %p119, %p120
      %p122 = scmp.ne.s32.totalorder %s111, %s114
      %p123 = scmp.eq.s32.totalorder %s17, 1
      %p124 = por %p122, %p123
      %p125 = scmp.ne.s32.totalorder %s114, %s115
      %p126 = scmp.eq.s32.totalorder %s17, 0
      %p127 = por %p125, %p126
      %p128 = scmp.ne.s32.totalorder %s114, %s115
      %p129 = scmp.eq.s32.totalorder %s18, 1
      %p130 = por %p128, %p129
      %p132 = scmp.ne.s32.totalorder %s115, %s131
      %p133 = scmp.eq.s32.totalorder %s18, 0
      %p134 = por %p132, %p133
      %p135 = scmp.le.s32.totalorder 1, %s12
      %p136 = scmp.lt.s32.totalorder %s12, 3
      %p137 = pnand %p135, %p136
      %p138 = pneg %p137
      // Predicated region
      $region9: #{net_forward.1} parent=5 // pred_check
        _
      $region10: #{net_forward.1} parent=5 // pred_check_branch
        %140 = sbr.rel (%p137) target = $region12
      $region11: #{net_forward.1} parent=5 // pred_region
        %s141 = ssub.s32 %s12, 1
        // Predicated region
        $region13: #{net_forward.1} parent=11 // pred_check
          %p142 = pneg %p59
        $region14: #{net_forward.1} parent=11 // pred_check_branch
          %144 = sbr.rel (%p142) target = $region16
        $region15: #{net_forward.1} parent=11 // pred_region
          _
        $region16: #{net_forward.1} parent=11 // pred_fallthru
          _
        // Predicated region
        $region17: #{net_forward.1} parent=11 // pred_check
          %p145 = pneg %p80
        $region18: #{net_forward.1} parent=11 // pred_check_branch
          %147 = sbr.rel (%p145) target = $region20
        $region19: #{net_forward.1} parent=11 // pred_region
          _
        $region20: #{net_forward.1} parent=11 // pred_fallthru
          _
        // Predicated region
        $region21: #{net_forward.1} parent=11 // pred_check
          %p148 = pneg %p101
        $region22: #{net_forward.1} parent=11 // pred_check_branch
          %150 = sbr.rel (%p148) target = $region24
        $region23: #{net_forward.1} parent=11 // pred_region
          _
        $region24: #{net_forward.1} parent=11 // pred_fallthru
          _
      $region12: #{net_forward.1} parent=5 // pred_fallthru
        _
      %p151 = scmp.lt.s32.totalorder %s12, 2
      // Predicated region
      $region25: #{net_forward.1} parent=5 // pred_check
        %p152 = pneg %p151
      $region26: #{net_forward.1} parent=5 // pred_check_branch
        %154 = sbr.rel (%p152) target = $region28
      $region27: #{net_forward.1} parent=5 // pred_region
        // Predicated region
        $region29: #{net_forward.1} parent=27 // pred_check
          %p155 = pneg %p32
        $region30: #{net_forward.1} parent=27 // pred_check_branch
          %157 = sbr.rel (%p155) target = $region32
        $region31: #{net_forward.1} parent=27 // pred_region
          %s158 = sand.u32 %s22, 1
          %s159 = sand.u32 %s22, 1
          %s160 = smul.addr %s159, 64
          %s161 = scalar_lea.vmem [#allocation3], %s160
          %s162 = smul.u32 4, %s12
          %s163 = smul.addr %s162, 8
          %s164 = scalar_lea.vmem %s0, %s163
          // Predicated region
          $region33: #{net_forward.1} parent=31 // pred_check
            _
          $region34: #{net_forward.1} parent=31 // pred_check_branch
            %166 = sbr.rel (0) target = $region36
          $region35: #{net_forward.1} parent=31 // pred_region
            // Predicated region
            $region37: #{net_forward.1} parent=35 // pred_check
              _
            $region38: #{net_forward.1} parent=35 // pred_check_branch
              %168 = sbr.rel (0) target = $region40
            $region39: #{net_forward.1} parent=35 // pred_region
              loop: start=0, step=1, limit=1
              $region41: #{net_forward.1} parent=39 // loop_pre_header
                _
              $region42: #{net_forward.1} parent=39 // loop_header
                %s170 = sphi 0, %s174
                %p171 = scmp.ge.s32.totalorder %s170, 1
                %s175 = sphi %s164, %s164
                %s176 = sphi %s161, %s161
              $region43: #{net_forward.1} parent=39 // loop_header_branch
                %173 = sbr.rel (%p171) target = $region47
              $region44: #{net_forward.1} parent=39 // loop_body
                %v177 = vld [vmem:[%s175] sm:$0xff]
                %178 = vst [vmem:[%s176] sm:$0xff] %v177
                %v179 = vld [vmem:[%s175 + $0x8] sm:$0xff]
                %180 = vst [vmem:[%s176 + $0x8] sm:$0xff] %v179
                %v181 = vld [vmem:[%s175 + $0x10] sm:$0xff]
                %182 = vst [vmem:[%s176 + $0x10] sm:$0xff] %v181
                %v183 = vld [vmem:[%s175 + $0x18] sm:$0xff]
                %184 = vst [vmem:[%s176 + $0x18] sm:$0xff] %v183
                %v185 = vld [vmem:[%s175 + $0x40] sm:$0xff]
                %186 = vst [vmem:[%s176 + $0x20] sm:$0xff] %v185
                %v187 = vld [vmem:[%s175 + $0x48] sm:$0xff]
                %188 = vst [vmem:[%s176 + $0x28] sm:$0xff] %v187
                %v189 = vld [vmem:[%s175 + $0x50] sm:$0xff]
                %190 = vst [vmem:[%s176 + $0x30] sm:$0xff] %v189
                %v191 = vld [vmem:[%s175 + $0x58] sm:$0xff]
                %192 = vst [vmem:[%s176 + $0x38] sm:$0xff] %v191
              $region45: #{net_forward.1} parent=39 // loop_footer
                %s174 = sadd.s32 1, %s170
              $region46: #{net_forward.1} parent=39 // loop_footer_branch
                %169 = sbr.rel target = $region42
              $region47: #{net_forward.1} parent=39 // loop_exit
                _
            $region40: #{net_forward.1} parent=35 // pred_fallthru
              _
            // Predicated region
            $region48: #{net_forward.1} parent=35 // pred_check
              _
            $region49: #{net_forward.1} parent=35 // pred_check_branch
              %194 = sbr.rel target = $region51
            $region50: #{net_forward.1} parent=35 // pred_region
              _
            $region51: #{net_forward.1} parent=35 // pred_fallthru
              _
          $region36: #{net_forward.1} parent=31 // pred_fallthru
            _
          %195 = vnop
        $region32: #{net_forward.1} parent=27 // pred_fallthru
          _
      $region28: #{net_forward.1} parent=5 // pred_fallthru
        _
      %p196 = scmp.le.s32.totalorder 1, %s12
      %p197 = scmp.lt.s32.totalorder %s12, 3
      %p198 = pnand %p196, %p197
      %p199 = pneg %p198
      // Predicated region
      $region52: #{net_forward.1} parent=5 // pred_check
        _
      $region53: #{net_forward.1} parent=5 // pred_check_branch
        %201 = sbr.rel (%p198) target = $region55
      $region54: #{net_forward.1} parent=5 // pred_region
        %s202 = ssub.s32 %s12, 1
        %s203 = sand.u32 %s25, 1
        %s204 = sand.u32 %s25, 1
        %s205 = smul.addr %s204, 64
        %s206 = scalar_lea.vmem [#allocation3], %s205
        // Predicated region
        $region56: #{net_forward.1} parent=54 // pred_check
          %p207 = pneg %p38
        $region57: #{net_forward.1} parent=54 // pred_check_branch
          %209 = sbr.rel (%p207) target = $region59
        $region58: #{net_forward.1} parent=54 // pred_region
          _
        $region59: #{net_forward.1} parent=54 // pred_fallthru
          _
        %s210 = sand.u32 %s25, 1
        %s211 = sand.u32 %s25, 1
        %s212 = smul.addr %s211, 64
        %s213 = scalar_lea.vmem [#allocation3], %s212
        %p214 = pneg %p38
        %p215 = pneg %p35
        %p216 = pneg %p59
        %p217 = pneg %p56
        %p218 = pneg %p80
        %p219 = pneg %p77
        %p220 = pneg %p101
        %p221 = pneg %p98
        %p222 = pneg %p127
        %p223 = pneg %p124
        %s224 = smul.u32 4, %s17
        %p225 = scmp.lt.s32.totalorder %s224, 7
        %s226 = scalar_select %p225, %s224, 7
        %s227 = scalar_lea.vmem %s4, %s226
        %s228 = smul.u32 4, %s17
        %s229 = smul.u32 4, %s17
        %p230 = scmp.lt.s32.totalorder %s229, 7
        %s231 = scalar_select %p230, %s229, 7
        %s232 = scalar_lea.vmem %s4, %s231
        %s233 = smul.u32 4, %s17
        %v234 = vld [vmem:[%s1] sm:$0xff]
        %v235 = vld [vmem:[%s1 + $0x8] sm:$0xff]
        %v236 = vld [vmem:[%s1 + $0x10] sm:$0xff]
        %v237 = vld [vmem:[%s1 + $0x18] sm:$0xff]
        %v238 = vld [vmem:[%s1 + $0x20] sm:$0xff]
        %v239 = vld [vmem:[%s1 + $0x28] sm:$0xff]
        %v240 = vld [vmem:[%s1 + $0x30] sm:$0xff]
        %v241 = vld [vmem:[%s1 + $0x38] sm:$0xff]
        %v242 = vld [vmem:[%s1 + $0x40] sm:$0xff]
        %v243 = vld [vmem:[%s1 + $0x48] sm:$0xff]
        %v244 = vld [vmem:[%s1 + $0x50] sm:$0xff]
        %v245 = vld [vmem:[%s1 + $0x58] sm:$0xff]
        %v246 = vld [vmem:[%s1 + $0x60] sm:$0xff]
        %v247 = vld [vmem:[%s1 + $0x68] sm:$0xff]
        %v248 = vld [vmem:[%s1 + $0x70] sm:$0xff]
        %v249 = vld [vmem:[%s1 + $0x78] sm:$0xff]
        %v250 = vld [vmem:[%s206] sm:$0xff]
        %v251 = vld [vmem:[%s206 + $0x8] sm:$0xff]
        %v252 = vld [vmem:[%s206 + $0x10] sm:$0xff]
        %v253 = vld [vmem:[%s206 + $0x18] sm:$0xff]
        %v254 = vld [vmem:[%s206 + $0x20] sm:$0x1]
        %v255 = vld [vmem:[%s206 + $0x28] sm:$0x1]
        %v256 = vld [vmem:[%s206 + $0x30] sm:$0x1]
        %v257 = vld [vmem:[%s206 + $0x38] sm:$0x1]
        %vm258 = vcmask 72704
        %v260 = vsel %vm258, %v234, 0
        %v263 = vsel %vm258, %v235, 0
        %v266 = vsel %vm258, %v236, 0
        %v269 = vsel %vm258, %v237, 0
        %v272 = vsel %vm258, %v238, 0
        %v275 = vsel %vm258, %v239, 0
        %v278 = vsel %vm258, %v240, 0
        %v281 = vsel %vm258, %v241, 0
        %v284 = vsel %vm258, %v242, 0
        %v287 = vsel %vm258, %v243, 0
        %v290 = vsel %vm258, %v244, 0
        %v293 = vsel %vm258, %v245, 0
        %v296 = vsel %vm258, %v246, 0
        %v299 = vsel %vm258, %v247, 0
        %v302 = vsel %vm258, %v248, 0
        %v305 = vsel %vm258, %v249, 0
        %vm307 = vcmask 1040384
        %v309 = vsel %vm307, %v254, 0
        %v312 = vsel %vm307, %v255, 0
        %v315 = vsel %vm307, %v256, 0
        %v318 = vsel %vm307, %v257, 0
        %320 = vmatprep.subr.mxu0 %v251
        %321 = vmatpush1.msra.mxu0 %v250
        %322 = vmatprep.subr.mxu0 %v312
        %323 = vmatpush1.msra.mxu0 %v309
        %324 = vmatprep.subr.mxu0 0.0
        %325 = vmatpush1.msra.mxu0 0.0
        %326 = vmatprep.subr.mxu0 0.0
        %327 = vmatpush1.msra.mxu0 0.0
        %328 = vmatprep.subr.mxu0 0.0
        %329 = vmatpush1.msra.mxu0 0.0
        %330 = vmatprep.subr.mxu0 0.0
        %331 = vmatpush1.msra.mxu0 0.0
        %332 = vmatprep.subr.mxu0 0.0
        %333 = vmatpush1.msra.mxu0 0.0
        %334 = vmatprep.subr.mxu0 0.0
        %335 = vmatpush1.msra.mxu0 0.0
        %336 = vmatprep.subr.mxu0 0.0
        %337 = vmatpush1.msra.mxu0 0.0
        %338 = vmatprep.subr.mxu0 0.0
        %339 = vmatpush1.msra.mxu0 0.0
        %340 = vmatprep.subr.mxu0 0.0
        %341 = vmatpush1.msra.mxu0 0.0
        %342 = vmatprep.subr.mxu0 0.0
        %343 = vmatpush1.msra.mxu0 0.0
        %344 = vmatprep.subr.mxu0 0.0
        %345 = vmatpush1.msra.mxu0 0.0
        %346 = vmatprep.subr.mxu0 0.0
        %347 = vmatpush1.msra.mxu0 0.0
        %348 = vmatprep.subr.mxu0 0.0
        %349 = vmatpush1.msra.mxu0 0.0
        %350 = vmatprep.subr.mxu0 0.0
        %351 = vmatpush1.msra.mxu0 0.0
        %352 = vmatprep.subr.mxu0 0.0
        %353 = vmatpush1.msra.mxu0 0.0
        %354 = vmatprep.subr.mxu0 0.0
        %355 = vmatpush1.msra.mxu0 0.0
        %356 = vmatprep.subr.mxu0 0.0
        %357 = vmatpush1.msra.mxu0 0.0
        %358 = vmatprep.subr.mxu0 0.0
        %359 = vmatpush1.msra.mxu0 0.0
        %360 = vmatprep.subr.mxu0 0.0
        %361 = vmatpush1.msra.mxu0 0.0
        %362 = vmatprep.subr.mxu0 0.0
        %363 = vmatpush1.msra.mxu0 0.0
        %364 = vmatprep.subr.mxu0 0.0
        %365 = vmatpush1.msra.mxu0 0.0
        %366 = vmatprep.subr.mxu0 0.0
        %367 = vmatpush1.msra.mxu0 0.0
        %368 = vmatprep.subr.mxu0 0.0
        %369 = vmatpush1.msra.mxu0 0.0
        %370 = vmatprep.subr.mxu0 0.0
        %371 = vmatpush1.msra.mxu0 0.0
        %372 = vmatprep.subr.mxu0 0.0
        %373 = vmatpush1.msra.mxu0 0.0
        %374 = vmatprep.subr.mxu0 0.0
        %375 = vmatpush1.msra.mxu0 0.0
        %376 = vmatprep.subr.mxu0 0.0
        %377 = vmatpush1.msra.mxu0 0.0
        %378 = vmatprep.subr.mxu0 0.0
        %379 = vmatpush1.msra.mxu0 0.0
        %380 = vmatprep.subr.mxu0 0.0
        %381 = vmatpush1.msra.mxu0 0.0
        %382 = vmatprep.subr.mxu0 0.0
        %383 = vmatpush1.msra.mxu0 0.0
        %384 = vmatprep.mubr.f32.mxu0 0.0
        %385 = vmatmul.mubr.f32.gmra.mrb[0].mxu0 %v260
        %v386 = vpop.f32.mrb[0].mxu0
        %v387 = vadd.f32 0.0, %v386
        %v388 = vpop.f32.mrb[0].mxu0
        %v389 = vadd.f32 0.0, %v388
        %390 = vmatprep.mubr.f32.mxu0 0.0
        %391 = vmatmul.mubr.f32.gmra.mrb[0].mxu0 %v263
        %v392 = vpop.f32.mrb[0].mxu0
        %v393 = vadd.f32 0.0, %v392
        %v394 = vpop.f32.mrb[0].mxu0
        %v395 = vadd.f32 0.0, %v394
        %396 = vmatprep.mubr.f32.mxu0 0.0
        %397 = vmatmul.mubr.f32.gmra.mrb[0].mxu0 %v266
        %v398 = vpop.f32.mrb[0].mxu0
        %v399 = vadd.f32 0.0, %v398
        %v400 = vpop.f32.mrb[0].mxu0
        %v401 = vadd.f32 0.0, %v400
        %402 = vmatprep.mubr.f32.mxu0 0.0
        %403 = vmatmul.mubr.f32.gmra.mrb[0].mxu0 %v269
        %v404 = vpop.f32.mrb[0].mxu0
        %v405 = vadd.f32 0.0, %v404
        %v406 = vpop.f32.mrb[0].mxu0
        %v407 = vadd.f32 0.0, %v406
        %408 = vmatprep.mubr.f32.mxu0 0.0
        %409 = vmatmul.mubr.f32.gmra.mrb[0].mxu0 %v272
        %v410 = vpop.f32.mrb[0].mxu0
        %v411 = vadd.f32 0.0, %v410
        %v412 = vpop.f32.mrb[0].mxu0
        %v413 = vadd.f32 0.0, %v412
        %414 = vmatprep.mubr.f32.mxu0 0.0
        %415 = vmatmul.mubr.f32.gmra.mrb[0].mxu0 %v275
        %v416 = vpop.f32.mrb[0].mxu0
        %v417 = vadd.f32 0.0, %v416
        %v418 = vpop.f32.mrb[0].mxu0
        %v419 = vadd.f32 0.0, %v418
        %420 = vmatprep.mubr.f32.mxu0 0.0
        %421 = vmatmul.mubr.f32.gmra.mrb[0].mxu0 %v278
        %v422 = vpop.f32.mrb[0].mxu0
        %v423 = vadd.f32 0.0, %v422
        %v424 = vpop.f32.mrb[0].mxu0
        %v425 = vadd.f32 0.0, %v424
        %426 = vmatprep.mubr.f32.mxu0 0.0
        %427 = vmatmul.mubr.f32.gmra.mrb[0].mxu0 %v281
        %v428 = vpop.f32.mrb[0].mxu0
        %v429 = vadd.f32 0.0, %v428
        %v430 = vpop.f32.mrb[0].mxu0
        %v431 = vadd.f32 0.0, %v430
        %432 = vmatprep.mubr.f32.mxu0 0.0
        %433 = vmatmul.mubr.f32.gmra.mrb[0].mxu0 %v284
        %v434 = vpop.f32.mrb[0].mxu0
        %v435 = vadd.f32 0.0, %v434
        %v436 = vpop.f32.mrb[0].mxu0
        %v437 = vadd.f32 0.0, %v436
        %438 = vmatprep.mubr.f32.mxu0 0.0
        %439 = vmatmul.mubr.f32.gmra.mrb[0].mxu0 %v287
        %v440 = vpop.f32.mrb[0].mxu0
        %v441 = vadd.f32 0.0, %v440
        %v442 = vpop.f32.mrb[0].mxu0
        %v443 = vadd.f32 0.0, %v442
        %444 = vmatprep.mubr.f32.mxu0 0.0
        %445 = vmatmul.mubr.f32.gmra.mrb[0].mxu0 %v290
        %v446 = vpop.f32.mrb[0].mxu0
        %v447 = vadd.f32 0.0, %v446
        %v448 = vpop.f32.mrb[0].mxu0
        %v449 = vadd.f32 0.0, %v448
        %450 = vmatprep.mubr.f32.mxu0 0.0
        %451 = vmatmul.mubr.f32.gmra.mrb[0].mxu0 %v293
        %v452 = vpop.f32.mrb[0].mxu0
        %v453 = vadd.f32 0.0, %v452
        %v454 = vpop.f32.mrb[0].mxu0
        %v455 = vadd.f32 0.0, %v454
        %456 = vmatprep.mubr.f32.mxu0 0.0
        %457 = vmatmul.mubr.f32.gmra.mrb[0].mxu0 %v296
        %v458 = vpop.f32.mrb[0].mxu0
        %v459 = vadd.f32 0.0, %v458
        %v460 = vpop.f32.mrb[0].mxu0
        %v461 = vadd.f32 0.0, %v460
        %462 = vmatprep.mubr.f32.mxu0 0.0
        %463 = vmatmul.mubr.f32.gmra.mrb[0].mxu0 %v299
        %v464 = vpop.f32.mrb[0].mxu0
        %v465 = vadd.f32 0.0, %v464
        %v466 = vpop.f32.mrb[0].mxu0
        %v467 = vadd.f32 0.0, %v466
        %468 = vmatprep.mubr.f32.mxu0 0.0
        %469 = vmatmul.mubr.f32.gmra.mrb[0].mxu0 %v302
        %v470 = vpop.f32.mrb[0].mxu0
        %v471 = vadd.f32 0.0, %v470
        %v472 = vpop.f32.mrb[0].mxu0
        %v473 = vadd.f32 0.0, %v472
        %474 = vmatprep.mubr.f32.mxu0 0.0
        %475 = vmatmul.mubr.f32.gmra.mrb[0].mxu0 %v305
        %v476 = vpop.f32.mrb[0].mxu0
        %v477 = vadd.f32 0.0, %v476
        %v478 = vpop.f32.mrb[0].mxu0
        %v479 = vadd.f32 0.0, %v478
        %480 = vdwg.mxu0
        %481 = vmatprep.subr.mxu0 %v253
        %482 = vmatpush1.msra.mxu0 %v252
        %483 = vmatprep.subr.mxu0 %v318
        %484 = vmatpush1.msra.mxu0 %v315
        %485 = vmatprep.subr.mxu0 0.0
        %486 = vmatpush1.msra.mxu0 0.0
        %487 = vmatprep.subr.mxu0 0.0
        %488 = vmatpush1.msra.mxu0 0.0
        %489 = vmatprep.subr.mxu0 0.0
        %490 = vmatpush1.msra.mxu0 0.0
        %491 = vmatprep.subr.mxu0 0.0
        %492 = vmatpush1.msra.mxu0 0.0
        %493 = vmatprep.subr.mxu0 0.0
        %494 = vmatpush1.msra.mxu0 0.0
        %495 = vmatprep.subr.mxu0 0.0
        %496 = vmatpush1.msra.mxu0 0.0
        %497 = vmatprep.subr.mxu0 0.0
        %498 = vmatpush1.msra.mxu0 0.0
        %499 = vmatprep.subr.mxu0 0.0
        %500 = vmatpush1.msra.mxu0 0.0
        %501 = vmatprep.subr.mxu0 0.0
        %502 = vmatpush1.msra.mxu0 0.0
        %503 = vmatprep.subr.mxu0 0.0
        %504 = vmatpush1.msra.mxu0 0.0
        %505 = vmatprep.subr.mxu0 0.0
        %506 = vmatpush1.msra.mxu0 0.0
        %507 = vmatprep.subr.mxu0 0.0
        %508 = vmatpush1.msra.mxu0 0.0
        %509 = vmatprep.subr.mxu0 0.0
        %510 = vmatpush1.msra.mxu0 0.0
        %511 = vmatprep.subr.mxu0 0.0
        %512 = vmatpush1.msra.mxu0 0.0
        %513 = vmatprep.subr.mxu0 0.0
        %514 = vmatpush1.msra.mxu0 0.0
        %515 = vmatprep.subr.mxu0 0.0
        %516 = vmatpush1.msra.mxu0 0.0
        %517 = vmatprep.subr.mxu0 0.0
        %518 = vmatpush1.msra.mxu0 0.0
        %519 = vmatprep.subr.mxu0 0.0
        %520 = vmatpush1.msra.mxu0 0.0
        %521 = vmatprep.subr.mxu0 0.0
        %522 = vmatpush1.msra.mxu0 0.0
        %523 = vmatprep.subr.mxu0 0.0
        %524 = vmatpush1.msra.mxu0 0.0
        %525 = vmatprep.subr.mxu0 0.0
        %526 = vmatpush1.msra.mxu0 0.0
        %527 = vmatprep.subr.mxu0 0.0
        %528 = vmatpush1.msra.mxu0 0.0
        %529 = vmatprep.subr.mxu0 0.0
        %530 = vmatpush1.msra.mxu0 0.0
        %531 = vmatprep.subr.mxu0 0.0
        %532 = vmatpush1.msra.mxu0 0.0
        %533 = vmatprep.subr.mxu0 0.0
        %534 = vmatpush1.msra.mxu0 0.0
        %535 = vmatprep.subr.mxu0 0.0
        %536 = vmatpush1.msra.mxu0 0.0
        %537 = vmatprep.subr.mxu0 0.0
        %538 = vmatpush1.msra.mxu0 0.0
        %539 = vmatprep.subr.mxu0 0.0
        %540 = vmatpush1.msra.mxu0 0.0
        %541 = vmatprep.subr.mxu0 0.0
        %542 = vmatpush1.msra.mxu0 0.0
        %543 = vmatprep.subr.mxu0 0.0
        %544 = vmatpush1.msra.mxu0 0.0
        %545 = vmatprep.mubr.f32.mxu0 0.0
        %546 = vmatmul.mubr.f32.gmra.mrb[0].mxu0 %v260
        %v547 = vpop.f32.mrb[0].mxu0
        %v548 = vadd.f32 0.0, %v547
        %v549 = vpop.f32.mrb[0].mxu0
        %v550 = vadd.f32 0.0, %v549
        %551 = vmatprep.mubr.f32.mxu0 0.0
        %552 = vmatmul.mubr.f32.gmra.mrb[0].mxu0 %v263
        %v553 = vpop.f32.mrb[0].mxu0
        %v554 = vadd.f32 0.0, %v553
        %v555 = vpop.f32.mrb[0].mxu0
        %v556 = vadd.f32 0.0, %v555
        %557 = vmatprep.mubr.f32.mxu0 0.0
        %558 = vmatmul.mubr.f32.gmra.mrb[0].mxu0 %v266
        %v559 = vpop.f32.mrb[0].mxu0
        %v560 = vadd.f32 0.0, %v559
        %v561 = vpop.f32.mrb[0].mxu0
        %v562 = vadd.f32 0.0, %v561
        %563 = vmatprep.mubr.f32.mxu0 0.0
        %564 = vmatmul.mubr.f32.gmra.mrb[0].mxu0 %v269
        %v565 = vpop.f32.mrb[0].mxu0
        %v566 = vadd.f32 0.0, %v565
        %v567 = vpop.f32.mrb[0].mxu0
        %v568 = vadd.f32 0.0, %v567
        %569 = vmatprep.mubr.f32.mxu0 0.0
        %570 = vmatmul.mubr.f32.gmra.mrb[0].mxu0 %v272
        %v571 = vpop.f32.mrb[0].mxu0
        %v572 = vadd.f32 0.0, %v571
        %v573 = vpop.f32.mrb[0].mxu0
        %v574 = vadd.f32 0.0, %v573
        %575 = vmatprep.mubr.f32.mxu0 0.0
        %576 = vmatmul.mubr.f32.gmra.mrb[0].mxu0 %v275
        %v577 = vpop.f32.mrb[0].mxu0
        %v578 = vadd.f32 0.0, %v577
        %v579 = vpop.f32.mrb[0].mxu0
        %v580 = vadd.f32 0.0, %v579
        %581 = vmatprep.mubr.f32.mxu0 0.0
        %582 = vmatmul.mubr.f32.gmra.mrb[0].mxu0 %v278
        %v583 = vpop.f32.mrb[0].mxu0
        %v584 = vadd.f32 0.0, %v583
        %v585 = vpop.f32.mrb[0].mxu0
        %v586 = vadd.f32 0.0, %v585
        %587 = vmatprep.mubr.f32.mxu0 0.0
        %588 = vmatmul.mubr.f32.gmra.mrb[0].mxu0 %v281
        %v589 = vpop.f32.mrb[0].mxu0
        %v590 = vadd.f32 0.0, %v589
        %v591 = vpop.f32.mrb[0].mxu0
        %v592 = vadd.f32 0.0, %v591
        %593 = vmatprep.mubr.f32.mxu0 0.0
        %594 = vmatmul.mubr.f32.gmra.mrb[0].mxu0 %v284
        %v595 = vpop.f32.mrb[0].mxu0
        %v596 = vadd.f32 0.0, %v595
        %v597 = vpop.f32.mrb[0].mxu0
        %v598 = vadd.f32 0.0, %v597
        %599 = vmatprep.mubr.f32.mxu0 0.0
        %600 = vmatmul.mubr.f32.gmra.mrb[0].mxu0 %v287
        %v601 = vpop.f32.mrb[0].mxu0
        %v602 = vadd.f32 0.0, %v601
        %v603 = vpop.f32.mrb[0].mxu0
        %v604 = vadd.f32 0.0, %v603
        %605 = vmatprep.mubr.f32.mxu0 0.0
        %606 = vmatmul.mubr.f32.gmra.mrb[0].mxu0 %v290
        %v607 = vpop.f32.mrb[0].mxu0
        %v608 = vadd.f32 0.0, %v607
        %v609 = vpop.f32.mrb[0].mxu0
        %v610 = vadd.f32 0.0, %v609
        %611 = vmatprep.mubr.f32.mxu0 0.0
        %612 = vmatmul.mubr.f32.gmra.mrb[0].mxu0 %v293
        %v613 = vpop.f32.mrb[0].mxu0
        %v614 = vadd.f32 0.0, %v613
        %v615 = vpop.f32.mrb[0].mxu0
        %v616 = vadd.f32 0.0, %v615
        %617 = vmatprep.mubr.f32.mxu0 0.0
        %618 = vmatmul.mubr.f32.gmra.mrb[0].mxu0 %v296
        %v619 = vpop.f32.mrb[0].mxu0
        %v620 = vadd.f32 0.0, %v619
        %v621 = vpop.f32.mrb[0].mxu0
        %v622 = vadd.f32 0.0, %v621
        %623 = vmatprep.mubr.f32.mxu0 0.0
        %624 = vmatmul.mubr.f32.gmra.mrb[0].mxu0 %v299
        %v625 = vpop.f32.mrb[0].mxu0
        %v626 = vadd.f32 0.0, %v625
        %v627 = vpop.f32.mrb[0].mxu0
        %v628 = vadd.f32 0.0, %v627
        %629 = vmatprep.mubr.f32.mxu0 0.0
        %630 = vmatmul.mubr.f32.gmra.mrb[0].mxu0 %v302
        %v631 = vpop.f32.mrb[0].mxu0
        %v632 = vadd.f32 0.0, %v631
        %v633 = vpop.f32.mrb[0].mxu0
        %v634 = vadd.f32 0.0, %v633
        %635 = vmatprep.mubr.f32.mxu0 0.0
        %636 = vmatmul.mubr.f32.gmra.mrb[0].mxu0 %v305
        %v637 = vpop.f32.mrb[0].mxu0
        %v638 = vadd.f32 0.0, %v637
        %v639 = vpop.f32.mrb[0].mxu0
        %v640 = vadd.f32 0.0, %v639
        %641 = vdwg.mxu0
        %v642 = vmax.f32 %v387, 0.0
        %v643 = vmax.f32 %v389, 0.0
        %v644 = vmax.f32 %v548, 0.0
        %v645 = vmax.f32 %v550, 0.0
        %v646 = vmax.f32 %v393, 0.0
        %v647 = vmax.f32 %v395, 0.0
        %v648 = vmax.f32 %v554, 0.0
        %v649 = vmax.f32 %v556, 0.0
        %v650 = vmax.f32 %v399, 0.0
        %v651 = vmax.f32 %v401, 0.0
        %v652 = vmax.f32 %v560, 0.0
        %v653 = vmax.f32 %v562, 0.0
        %v654 = vmax.f32 %v405, 0.0
        %v655 = vmax.f32 %v407, 0.0
        %v656 = vmax.f32 %v566, 0.0
        %v657 = vmax.f32 %v568, 0.0
        %v658 = vmax.f32 %v411, 0.0
        %v659 = vmax.f32 %v413, 0.0
        %v660 = vmax.f32 %v572, 0.0
        %v661 = vmax.f32 %v574, 0.0
        %v662 = vmax.f32 %v417, 0.0
        %v663 = vmax.f32 %v419, 0.0
        %v664 = vmax.f32 %v578, 0.0
        %v665 = vmax.f32 %v580, 0.0
        %v666 = vmax.f32 %v423, 0.0
        %v667 = vmax.f32 %v425, 0.0
        %v668 = vmax.f32 %v584, 0.0
        %v669 = vmax.f32 %v586, 0.0
        %v670 = vmax.f32 %v429, 0.0
        %v671 = vmax.f32 %v431, 0.0
        %v672 = vmax.f32 %v590, 0.0
        %v673 = vmax.f32 %v592, 0.0
        %v674 = vmax.f32 %v435, 0.0
        %v675 = vmax.f32 %v437, 0.0
        %v676 = vmax.f32 %v596, 0.0
        %v677 = vmax.f32 %v598, 0.0
        %v678 = vmax.f32 %v441, 0.0
        %v679 = vmax.f32 %v443, 0.0
        %v680 = vmax.f32 %v602, 0.0
        %v681 = vmax.f32 %v604, 0.0
        %v682 = vmax.f32 %v447, 0.0
        %v683 = vmax.f32 %v449, 0.0
        %v684 = vmax.f32 %v608, 0.0
        %v685 = vmax.f32 %v610, 0.0
        %v686 = vmax.f32 %v453, 0.0
        %v687 = vmax.f32 %v455, 0.0
        %v688 = vmax.f32 %v614, 0.0
        %v689 = vmax.f32 %v616, 0.0
        %v690 = vmax.f32 %v459, 0.0
        %v691 = vmax.f32 %v461, 0.0
        %v692 = vmax.f32 %v620, 0.0
        %v693 = vmax.f32 %v622, 0.0
        %v694 = vmax.f32 %v465, 0.0
        %v695 = vmax.f32 %v467, 0.0
        %v696 = vmax.f32 %v626, 0.0
        %v697 = vmax.f32 %v628, 0.0
        %v698 = vmax.f32 %v471, 0.0
        %v699 = vmax.f32 %v473, 0.0
        %v700 = vmax.f32 %v632, 0.0
        %v701 = vmax.f32 %v634, 0.0
        %v702 = vmax.f32 %v477, 0.0
        %v703 = vmax.f32 %v479, 0.0
        %v704 = vmax.f32 %v638, 0.0
        %v705 = vmax.f32 %v640, 0.0
        %v706 = vld [vmem:[%s2] sm:$0x1]
        %v707 = vld [vmem:[#allocation2] sm:$0x1]
        %709 = vset.pattern.permute.xlu0 0
        %710 = vperm.xlu0 %709, %v707
        %v711 = vpop.permute.xlu0 %710
        %v713 = vlaneseq
        %v714 = vshrl.u32 %v713, 7
        %v715 = vsub.s32 0, %v714
        %v716 = vrot.slane %v711, %v715
        %717 = vmatprep.subr.mxu0 %v643
        %718 = vmatpush1.msra.mxu0 %v642
        %719 = vmatprep.subr.mxu0 %v647
        %720 = vmatpush1.msra.mxu0 %v646
        %721 = vmatprep.subr.mxu0 %v651
        %722 = vmatpush1.msra.mxu0 %v650
        %723 = vmatprep.subr.mxu0 %v655
        %724 = vmatpush1.msra.mxu0 %v654
        %725 = vmatprep.subr.mxu0 %v659
        %726 = vmatpush1.msra.mxu0 %v658
        %727 = vmatprep.subr.mxu0 %v663
        %728 = vmatpush1.msra.mxu0 %v662
        %729 = vmatprep.subr.mxu0 %v667
        %730 = vmatpush1.msra.mxu0 %v666
        %731 = vmatprep.subr.mxu0 %v671
        %732 = vmatpush1.msra.mxu0 %v670
        %733 = vmatprep.subr.mxu0 %v675
        %734 = vmatpush1.msra.mxu0 %v674
        %735 = vmatprep.subr.mxu0 %v679
        %736 = vmatpush1.msra.mxu0 %v678
        %737 = vmatprep.subr.mxu0 %v683
        %738 = vmatpush1.msra.mxu0 %v682
        %739 = vmatprep.subr.mxu0 %v687
        %740 = vmatpush1.msra.mxu0 %v686
        %741 = vmatprep.subr.mxu0 %v691
        %742 = vmatpush1.msra.mxu0 %v690
        %743 = vmatprep.subr.mxu0 %v695
        %744 = vmatpush1.msra.mxu0 %v694
        %745 = vmatprep.subr.mxu0 %v699
        %746 = vmatpush1.msra.mxu0 %v698
        %747 = vmatprep.subr.mxu0 %v703
        %748 = vmatpush1.msra.mxu0 %v702
        %749 = vmatprep.subr.mxu0 0.0
        %750 = vmatpush1.msra.mxu0 0.0
        %751 = vmatprep.subr.mxu0 0.0
        %752 = vmatpush1.msra.mxu0 0.0
        %753 = vmatprep.subr.mxu0 0.0
        %754 = vmatpush1.msra.mxu0 0.0
        %755 = vmatprep.subr.mxu0 0.0
        %756 = vmatpush1.msra.mxu0 0.0
        %757 = vmatprep.subr.mxu0 0.0
        %758 = vmatpush1.msra.mxu0 0.0
        %759 = vmatprep.subr.mxu0 0.0
        %760 = vmatpush1.msra.mxu0 0.0
        %761 = vmatprep.subr.mxu0 0.0
        %762 = vmatpush1.msra.mxu0 0.0
        %763 = vmatprep.subr.mxu0 0.0
        %764 = vmatpush1.msra.mxu0 0.0
        %765 = vmatprep.subr.mxu0 0.0
        %766 = vmatpush1.msra.mxu0 0.0
        %767 = vmatprep.subr.mxu0 0.0
        %768 = vmatpush1.msra.mxu0 0.0
        %769 = vmatprep.subr.mxu0 0.0
        %770 = vmatpush1.msra.mxu0 0.0
        %771 = vmatprep.subr.mxu0 0.0
        %772 = vmatpush1.msra.mxu0 0.0
        %773 = vmatprep.subr.mxu0 0.0
        %774 = vmatpush1.msra.mxu0 0.0
        %775 = vmatprep.subr.mxu0 0.0
        %776 = vmatpush1.msra.mxu0 0.0
        %777 = vmatprep.subr.mxu0 0.0
        %778 = vmatpush1.msra.mxu0 0.0
        %779 = vmatprep.subr.mxu0 0.0
        %780 = vmatpush1.msra.mxu0 0.0
        %781 = vmatprep.mubr.f32.mxu0 0.0
        %782 = vmatmul.mubr.f32.gmra.mrb[0].mxu0 %v706
        %v783 = vpop.f32.mrb[0].mxu0
        %v784 = vadd.f32 %v716, %v783
        %v785 = vpop.f32.mrb[0].mxu0
        %v786 = vadd.f32 %v716, %v785
        %787 = vdwg.mxu0
        %788 = vmatprep.subr.mxu0 %v645
        %789 = vmatpush1.msra.mxu0 %v644
        %790 = vmatprep.subr.mxu0 %v649
        %791 = vmatpush1.msra.mxu0 %v648
        %792 = vmatprep.subr.mxu0 %v653
        %793 = vmatpush1.msra.mxu0 %v652
        %794 = vmatprep.subr.mxu0 %v657
        %795 = vmatpush1.msra.mxu0 %v656
        %796 = vmatprep.subr.mxu0 %v661
        %797 = vmatpush1.msra.mxu0 %v660
        %798 = vmatprep.subr.mxu0 %v665
        %799 = vmatpush1.msra.mxu0 %v664
        %800 = vmatprep.subr.mxu0 %v669
        %801 = vmatpush1.msra.mxu0 %v668
        %802 = vmatprep.subr.mxu0 %v673
        %803 = vmatpush1.msra.mxu0 %v672
        %804 = vmatprep.subr.mxu0 %v677
        %805 = vmatpush1.msra.mxu0 %v676
        %806 = vmatprep.subr.mxu0 %v681
        %807 = vmatpush1.msra.mxu0 %v680
        %808 = vmatprep.subr.mxu0 %v685
        %809 = vmatpush1.msra.mxu0 %v684
        %810 = vmatprep.subr.mxu0 %v689
        %811 = vmatpush1.msra.mxu0 %v688
        %812 = vmatprep.subr.mxu0 %v693
        %813 = vmatpush1.msra.mxu0 %v692
        %814 = vmatprep.subr.mxu0 %v697
        %815 = vmatpush1.msra.mxu0 %v696
        %816 = vmatprep.subr.mxu0 %v701
        %817 = vmatpush1.msra.mxu0 %v700
        %818 = vmatprep.subr.mxu0 %v705
        %819 = vmatpush1.msra.mxu0 %v704
        %820 = vmatprep.subr.mxu0 0.0
        %821 = vmatpush1.msra.mxu0 0.0
        %822 = vmatprep.subr.mxu0 0.0
        %823 = vmatpush1.msra.mxu0 0.0
        %824 = vmatprep.subr.mxu0 0.0
        %825 = vmatpush1.msra.mxu0 0.0
        %826 = vmatprep.subr.mxu0 0.0
        %827 = vmatpush1.msra.mxu0 0.0
        %828 = vmatprep.subr.mxu0 0.0
        %829 = vmatpush1.msra.mxu0 0.0
        %830 = vmatprep.subr.mxu0 0.0
        %831 = vmatpush1.msra.mxu0 0.0
        %832 = vmatprep.subr.mxu0 0.0
        %833 = vmatpush1.msra.mxu0 0.0
        %834 = vmatprep.subr.mxu0 0.0
        %835 = vmatpush1.msra.mxu0 0.0
        %836 = vmatprep.subr.mxu0 0.0
        %837 = vmatpush1.msra.mxu0 0.0
        %838 = vmatprep.subr.mxu0 0.0
        %839 = vmatpush1.msra.mxu0 0.0
        %840 = vmatprep.subr.mxu0 0.0
        %841 = vmatpush1.msra.mxu0 0.0
        %842 = vmatprep.subr.mxu0 0.0
        %843 = vmatpush1.msra.mxu0 0.0
        %844 = vmatprep.subr.mxu0 0.0
        %845 = vmatpush1.msra.mxu0 0.0
        %846 = vmatprep.subr.mxu0 0.0
        %847 = vmatpush1.msra.mxu0 0.0
        %848 = vmatprep.subr.mxu0 0.0
        %849 = vmatpush1.msra.mxu0 0.0
        %850 = vmatprep.subr.mxu0 0.0
        %851 = vmatpush1.msra.mxu0 0.0
        %852 = vmatprep.mubr.f32.mxu0 0.0
        %853 = vmatmul.mubr.f32.gmra.mrb[0].mxu0 %v706
        %v854 = vpop.f32.mrb[0].mxu0
        %v855 = vadd.f32 %v716, %v854
        %v856 = vpop.f32.mrb[0].mxu0
        %v857 = vadd.f32 %v716, %v856
        %858 = vdwg.mxu0
        %v859 = vxor.u32 %v784, 2147483648
        %v860 = vxor.u32 %v786, 2147483648
        %v861 = vxor.u32 %v855, 2147483648
        %v862 = vxor.u32 %v857, 2147483648
        %v863 = vmul.f32 %v859, 1.442695
        %v864 = vpow.pop %v863
        %v865 = vmul.f32 %v860, 1.442695
        %v866 = vpow.pop %v865
        %v867 = vmul.f32 %v861, 1.442695
        %v868 = vpow.pop %v867
        %v869 = vmul.f32 %v862, 1.442695
        %v870 = vpow.pop %v869
        %v871 = vadd.f32 %v864, 1.0
        %v872 = vadd.f32 %v866, 1.0
        %v873 = vadd.f32 %v868, 1.0
        %v874 = vadd.f32 %v870, 1.0
        %v875 = vrcp.pop %v871
        %v876 = vmul.f32 1.0, %v875
        %v877 = vrcp.pop %v872
        %v878 = vmul.f32 1.0, %v877
        %v879 = vrcp.pop %v873
        %v880 = vmul.f32 1.0, %v879
        %v881 = vrcp.pop %v874
        %v882 = vmul.f32 1.0, %v881
        %v887 = vcombine.low %v876, %v878
        %v888 = vcombine.low %v880, %v882
        %v890 = vunpack.c.l.s4 1966171168
        %v891 = vunpack.c.0.s8 %v890
        %v892 = vlaneseq
        %v893 = vshrl.u32 %v892, 7
        %v894 = vsub.s32 %v891, %v893
        %v895 = vrot.slane %v887, %v894
        %v897 = vunpack.c.l.s4 1966171168
        %v898 = vunpack.c.0.s8 %v897
        %v899 = vlaneseq
        %v900 = vshrl.u32 %v899, 7
        %v901 = vsub.s32 %v898, %v900
        %v902 = vrot.slane %v888, %v901
        %v903 = vcombine.low %v895, %v902
        %v905 = vunpack.c.l.s4 1966171168
        %v906 = vunpack.c.0.s8 %v905
        %v907 = vlaneseq
        %v908 = vshrl.u32 %v907, 7
        %v909 = vsub.s32 %v906, %v908
        %v910 = vrot.slane %v903, %v909
        %v912 = vlaneseq
        %vm913 = vcmp.ge.s32.totalorder %v912, 0
        %vm914 = vcmp.lt.s32.totalorder %v912, 512
        %vm915 = vmand %vm913, %vm914
        %916 = vst.msk [vmem:[%s232] sm:$0xf] %vm915, %v910
        %s917 = smul.u32 4, %s17
        %p918 = scmp.lt.s32.totalorder %s917, 7
        %s919 = scalar_select %p918, %s917, 7
        %s920 = scalar_lea.vmem %s4, %s919
        // Predicated region
        $region60: #{net_forward.1} parent=54 // pred_check
          %p921 = pneg %p124
        $region61: #{net_forward.1} parent=54 // pred_check_branch
          %923 = sbr.rel (%p921) target = $region63
        $region62: #{net_forward.1} parent=54 // pred_region
          %s924 = smul.u32 4, %s17
        $region63: #{net_forward.1} parent=54 // pred_fallthru
          _
      $region55: #{net_forward.1} parent=5 // pred_fallthru
        _
      %p925 = scmp.le.s32.totalorder 2, %s12
      // Predicated region
      $region64: #{net_forward.1} parent=5 // pred_check
        %p926 = pneg %p925
      $region65: #{net_forward.1} parent=5 // pred_check_branch
        %928 = sbr.rel (%p926) target = $region67
      $region66: #{net_forward.1} parent=5 // pred_region
        %s929 = ssub.s32 %s12, 2
        // Predicated region
        $region68: #{net_forward.1} parent=66 // pred_check
          %p930 = pneg %p130
        $region69: #{net_forward.1} parent=66 // pred_check_branch
          %932 = sbr.rel (%p930) target = $region71
        $region70: #{net_forward.1} parent=66 // pred_region
          %s933 = smul.u32 4, %s18
          %p934 = scmp.lt.s32.totalorder %s933, 7
          %s935 = scalar_select %p934, %s933, 7
          %s936 = scalar_lea.vmem %s4, %s935
        $region71: #{net_forward.1} parent=66 // pred_fallthru
          _
      $region67: #{net_forward.1} parent=5 // pred_fallthru
        _
    $region6: #{net_forward.1} parent=1 // loop_footer
      %s16 = sadd.s32 1, %s12
    $region7: #{net_forward.1} parent=1 // loop_footer_branch
      %11 = sbr.rel target = $region3
    $region8: #{net_forward.1} parent=1 // loop_exit
      _

</llo_original>
